<compile_context>
chip_gen: v7x
topology: tpu7x:2x2x1
jax: 0.10.0
libtpu: 0.0.40
codegen_flags: <defaults>
</compile_context>

<pallas_src>
import functools

import jax
import jax.numpy as jnp
from jax import lax
from jax.experimental import pallas as pl
from jax.experimental.pallas import tpu as pltpu


def _embedding_gather_kernel(ids_ref, tgt_hbm, pos_ref, out_ref, row_buf, sems,
                             *, seq_len, window, chunk):
    """tgt_emb row-gather from HBM + positional add.

    ids_ref : SMEM (B*S,) int32   -- token ids (scalar prefetch, flattened)
    tgt_hbm : HBM  (V, D)         -- embedding table (never copied wholesale)
    pos_ref : VMEM (T, D)         -- pos rows [j*T, j*T+T) (auto-pipelined,
                                     refetch elided across the inner b axis)
    out_ref : VMEM (T, D)         -- output tile (batch dim squeezed)
    row_buf : VMEM (T, D)         -- gather staging buffer
    sems    : DMA sems (K,)       -- K-deep rolling window of row DMAs
    """
    j = pl.program_id(0)          # token-tile index (outer grid axis)
    b = pl.program_id(1)          # batch index (inner grid axis)
    T, _ = out_ref.shape
    V = tgt_hbm.shape[0]
    K = window

    base = b * seq_len + j * T    # flat offset of this tile's ids in SMEM

    def tok_at(i):
        # Clamp untrusted ids so the DMA never reads outside the table.
        # (PyTorch nn.Embedding would raise on out-of-range ids; we clamp.)
        return jnp.clip(ids_ref[base + i], 0, V - 1)

    def start_row(i, tok):
        pltpu.make_async_copy(
            tgt_hbm.at[pl.ds(tok, 1), :],
            row_buf.at[pl.ds(i, 1), :],
            sems.at[i & (K - 1)],
        ).start()

    def wait_row(i):
        # Only the dest shape and the semaphore matter for wait(): use a
        # constant source slice so the drain does no SMEM reads / clamping.
        pltpu.make_async_copy(
            tgt_hbm.at[pl.ds(0, 1), :],
            row_buf.at[pl.ds(i, 1), :],
            sems.at[i & (K - 1)],
        ).wait()

    def emit_chunk(r0):
        # Interleaved epilogue: add pos + store `chunk` completed rows
        # (sublane/lane aligned) while later row DMAs are still in flight.
        out_ref[pl.ds(r0, chunk), :] = (
            row_buf[pl.ds(r0, chunk), :].astype(jnp.float32)
            + pos_ref[pl.ds(r0, chunk), :].astype(jnp.float32)
        ).astype(out_ref.dtype)

    # ---- Prime: fill the K-deep DMA window (statically unrolled). ----
    for i in range(K):
        start_row(i, tok_at(i))

    n_chunks = T // chunk
    n_steady = n_chunks - K // chunk   # chunks for which a refill row exists

    # ---- Steady state: wait chunk c, refill the window, store chunk c. ----
    def steady_body(c, carry):
        r0 = pl.multiple_of(c * chunk, chunk)
        # SMEM id reads for the next window happen *before* any DMA wait.
        next_toks = [tok_at(r0 + u + K) for u in range(chunk)]
        for u in range(chunk):
            wait_row(r0 + u)
            start_row(r0 + u + K, next_toks[u])
        emit_chunk(r0)
        return carry

    if n_steady > 0:
        lax.fori_loop(0, n_steady, steady_body, None)

    # ---- Tail: last K rows; static indices, waits + stores only. ----
    for c in range(n_steady, n_chunks):
        r0 = c * chunk
        for u in range(chunk):
            wait_row(r0 + u)
        emit_chunk(r0)


def _pow2_floor(n):
    p = 1
    while p * 2 <= n:
        p *= 2
    return p


def _tpu_defaults():
    """Generation-scaled defaults for DMA window / VMEM budget."""
    vmem_bytes = 64 << 20
    try:
        info = pltpu.get_tpu_info()
        vmem_bytes = int(getattr(info, "vmem_capacity_bytes", vmem_bytes))
    except Exception:
        pass
    if vmem_bytes <= (64 << 20):
        # v7x-class: ~3.2 TB/s HBM, 64 MiB VMEM -> more DMAs in flight.
        return {"dma_window": 64, "vmem_budget": 12 << 20}
    # v5e / v6e: 128 MiB VMEM.
    return {"dma_window": 32, "vmem_budget": 12 << 20}


def _choose_tile(S, D, itemsize, seq_tile, vmem_budget_bytes):
    """Largest divisor of S that is a multiple of 8, <= seq_tile and fits the
    VMEM budget (row_buf + 2x pos + 2x out ~= 5*T*D*itemsize)."""
    cap = max(1, vmem_budget_bytes // (5 * D * itemsize))
    cap = min(cap, seq_tile, S)
    for t in range(cap, 0, -1):
        if S % t == 0 and (t % 8 == 0 or t == S):
            return t
    # TODO(synk): pad S to a multiple of 8 and mask instead of falling back to
    # a whole-sequence tile when S has no suitable divisor.
    return S


def embedding_forward(x_ids, tgt_table, pos_table, *, seq_tile=256,
                      dma_window=None, vmem_budget_bytes=None):
    """x_ids: (B, S) int, tgt_table: (V, D), pos_table: (P, D) -> (B, S, D)."""
    B, S = x_ids.shape
    V, D = tgt_table.shape
    P, _ = pos_table.shape
    if S > P:
        raise ValueError("sequence length exceeds max_pos of the positional table")

    defaults = _tpu_defaults()
    if dma_window is None:
        dma_window = defaults["dma_window"]
    if vmem_budget_bytes is None:
        vmem_budget_bytes = defaults["vmem_budget"]

    itemsize = jnp.dtype(tgt_table.dtype).itemsize
    T = _choose_tile(S, D, itemsize, seq_tile, vmem_budget_bytes)

    # Rows per interleaved-epilogue chunk: 8 sublanes worth of rows for the
    # table dtype (8 for f32, 16 for bf16), reduced to a power of two dividing T.
    pack = max(1, 4 // itemsize)
    chunk = 1
    while chunk * 2 <= 8 * pack and T % (chunk * 2) == 0:
        chunk *= 2

    # DMA window: power of two, >= chunk, <= T.
    K = _pow2_floor(min(dma_window, T))
    K = max(K, chunk)

    ids_flat = x_ids.astype(jnp.int32).reshape(B * S)
    pos_used = pos_table[:S]      # only the S rows this forward pass touches

    kernel = functools.partial(_embedding_gather_kernel,
                               seq_len=S, window=K, chunk=chunk)

    return pl.pallas_call(
        kernel,
        out_shape=jax.ShapeDtypeStruct((B, S, D), tgt_table.dtype),
        grid_spec=pltpu.PrefetchScalarGridSpec(
            num_scalar_prefetch=1,                 # ids -> SMEM
            grid=(S // T, B),                      # token-tile outer, batch inner
            in_specs=[
                pl.BlockSpec(memory_space=pl.ANY),                # table stays in HBM
                pl.BlockSpec((T, D), lambda j, b, ids: (j, 0)),   # pos tile, reused over b
            ],
            out_specs=pl.BlockSpec((None, T, D), lambda j, b, ids: (b, j, 0)),
            scratch_shapes=[
                pltpu.VMEM((T, D), tgt_table.dtype),              # gather staging buffer
                pltpu.SemaphoreType.DMA((K,)),
            ],
        ),
        compiler_params=pltpu.CompilerParams(
            dimension_semantics=("parallel", "parallel")),
    )(ids_flat, tgt_table, pos_used)


if __name__ == "__main__":
    # Small, self-consistent config (args.vocab_size, args.max_pos, args.d_model)
    VOCAB, MAX_POS, D_MODEL = 64, 128, 128

    key = jax.random.PRNGKey(0)
    k_tgt, k_pos, k_ids1, k_ids2 = jax.random.split(key, 4)

    # Deterministic "nn.Embedding" weights (synthetic init)
    tgt_table = jax.random.normal(k_tgt, (VOCAB, D_MODEL), jnp.float32) * 0.02
    pos_table = jax.random.normal(k_pos, (MAX_POS, D_MODEL), jnp.float32) * 0.02

    # --- Test 1: tiny sequence, single tile (tail-only path) ---
    B1, S1 = 2, 8
    x1 = jax.random.randint(k_ids1, (B1, S1), 0, VOCAB, dtype=jnp.int32)
    out1 = jax.block_until_ready(embedding_forward(x1, tgt_table, pos_table))
    ref1 = tgt_table[x1] + pos_table[jnp.arange(S1)][None, :, :]
    assert out1.shape == (B1, S1, D_MODEL), out1.shape
    assert jnp.allclose(out1, ref1, atol=1e-5, rtol=1e-5), "mismatch (test 1)"

    # --- Test 2: multi-tile grid, exercises the steady-state rolling window ---
    B2, S2 = 2, 128
    x2 = jax.random.randint(k_ids2, (B2, S2), 0, VOCAB, dtype=jnp.int32)
    out2 = jax.block_until_ready(
        embedding_forward(x2, tgt_table, pos_table, seq_tile=64, dma_window=16))
    ref2 = tgt_table[x2] + pos_table[jnp.arange(S2)][None, :, :]
    assert out2.shape == (B2, S2, D_MODEL), out2.shape
    assert jnp.allclose(out2, ref2, atol=1e-5, rtol=1e-5), "mismatch (test 2)"

    print("KERNEL_OK")
</pallas_src>

<mosaic_0001>
module attributes {stable_mosaic.version = 11 : i64} {
  func.func @_embedding_gather_kernel(%arg0: i32, %arg1: i32, %arg2: memref<16xi32, #tpu.memory_space<smem>>, %arg3: memref<64x128xf32, #tpu.memory_space<any>>, %arg4: memref<8x128xf32, #tpu.memory_space<vmem>>, %arg5: memref<1x8x128xf32, #tpu.memory_space<vmem>>, %arg6: memref<8x128xf32, #tpu.memory_space<vmem>>, %arg7: memref<8x!tpu.dma_semaphore, #tpu.memory_space<semaphore_mem>>) attributes {dimension_semantics = [#tpu.dimension_semantics<parallel>, #tpu.dimension_semantics<parallel>], iteration_bounds = array<i64: 1, 2>, scalar_prefetch = 1 : i64, scratch_operands = 2 : i64, tpu.core_type = #tpu.core_type<tc>, window_params = [{}, {transform_indices = @transform_1, window_bounds = array<i64: 8, 128>}, {transform_indices = @transform_2, window_bounds = array<i64: 1, 8, 128>}]} {
    %c8_i32 = arith.constant 8 : i32
    %0 = arith.muli %arg1, %c8_i32 : i32
    %c8_i32_0 = arith.constant 8 : i32
    %1 = arith.muli %arg0, %c8_i32_0 : i32
    %2 = arith.addi %0, %1 : i32
    %c0_i32 = arith.constant 0 : i32
    %3 = arith.addi %2, %c0_i32 : i32
    %4 = arith.index_cast %3 : i32 to index
    %5 = memref.load %arg2[%4] : memref<16xi32, #tpu.memory_space<smem>>
    %c0_i32_1 = arith.constant 0 : i32
    %c63_i32 = arith.constant 63 : i32
    %6 = arith.maxsi %c0_i32_1, %5 : i32
    %7 = arith.minsi %c63_i32, %6 : i32
    %c0_i32_2 = arith.constant 0 : i32
    %c0_i32_3 = arith.constant 0 : i32
    %8 = tpu.memref_slice %arg3[%7, %c0_i32_3] : memref<64x128xf32, #tpu.memory_space<any>> -> memref<1x128xf32, #tpu.memory_space<any>>
    %c0_i32_4 = arith.constant 0 : i32
    %c0_i32_5 = arith.constant 0 : i32
    %9 = tpu.memref_slice %arg6[%c0_i32_4, %c0_i32_5] : memref<8x128xf32, #tpu.memory_space<vmem>> -> memref<1x128xf32, #tpu.memory_space<vmem>>
    %10 = tpu.memref_slice %arg7[%c0_i32_2] : memref<8x!tpu.dma_semaphore, #tpu.memory_space<semaphore_mem>> -> memref<1x!tpu.dma_semaphore, #tpu.memory_space<semaphore_mem>>
    %11 = tpu.memref_squeeze %10 : memref<1x!tpu.dma_semaphore, #tpu.memory_space<semaphore_mem>> -> memref<!tpu.dma_semaphore, #tpu.memory_space<semaphore_mem>>
    tpu.enqueue_dma source(%8 : memref<1x128xf32, #tpu.memory_space<any>>) target(%9 : memref<1x128xf32, #tpu.memory_space<vmem>>) target_semaphore(%11 : memref<!tpu.dma_semaphore, #tpu.memory_space<semaphore_mem>>)
    %c1_i32 = arith.constant 1 : i32
    %12 = arith.addi %2, %c1_i32 : i32
    %13 = arith.index_cast %12 : i32 to index
    %14 = memref.load %arg2[%13] : memref<16xi32, #tpu.memory_space<smem>>
    %c0_i32_6 = arith.constant 0 : i32
    %c63_i32_7 = arith.constant 63 : i32
    %15 = arith.maxsi %c0_i32_6, %14 : i32
    %16 = arith.minsi %c63_i32_7, %15 : i32
    %c1_i32_8 = arith.constant 1 : i32
    %c0_i32_9 = arith.constant 0 : i32
    %17 = tpu.memref_slice %arg3[%16, %c0_i32_9] : memref<64x128xf32, #tpu.memory_space<any>> -> memref<1x128xf32, #tpu.memory_space<any>>
    %c1_i32_10 = arith.constant 1 : i32
    %c0_i32_11 = arith.constant 0 : i32
    %18 = tpu.memref_slice %arg6[%c1_i32_10, %c0_i32_11] : memref<8x128xf32, #tpu.memory_space<vmem>> -> memref<1x128xf32, #tpu.memory_space<vmem>>
    %19 = tpu.memref_slice %arg7[%c1_i32_8] : memref<8x!tpu.dma_semaphore, #tpu.memory_space<semaphore_mem>> -> memref<1x!tpu.dma_semaphore, #tpu.memory_space<semaphore_mem>>
    %20 = tpu.memref_squeeze %19 : memref<1x!tpu.dma_semaphore, #tpu.memory_space<semaphore_mem>> -> memref<!tpu.dma_semaphore, #tpu.memory_space<semaphore_mem>>
    tpu.enqueue_dma source(%17 : memref<1x128xf32, #tpu.memory_space<any>>) target(%18 : memref<1x128xf32, #tpu.memory_space<vmem>>) target_semaphore(%20 : memref<!tpu.dma_semaphore, #tpu.memory_space<semaphore_mem>>)
    %c2_i32 = arith.constant 2 : i32
    %21 = arith.addi %2, %c2_i32 : i32
    %22 = arith.index_cast %21 : i32 to index
    %23 = memref.load %arg2[%22] : memref<16xi32, #tpu.memory_space<smem>>
    %c0_i32_12 = arith.constant 0 : i32
    %c63_i32_13 = arith.constant 63 : i32
    %24 = arith.maxsi %c0_i32_12, %23 : i32
    %25 = arith.minsi %c63_i32_13, %24 : i32
    %c2_i32_14 = arith.constant 2 : i32
    %c0_i32_15 = arith.constant 0 : i32
    %26 = tpu.memref_slice %arg3[%25, %c0_i32_15] : memref<64x128xf32, #tpu.memory_space<any>> -> memref<1x128xf32, #tpu.memory_space<any>>
    %c2_i32_16 = arith.constant 2 : i32
    %c0_i32_17 = arith.constant 0 : i32
    %27 = tpu.memref_slice %arg6[%c2_i32_16, %c0_i32_17] : memref<8x128xf32, #tpu.memory_space<vmem>> -> memref<1x128xf32, #tpu.memory_space<vmem>>
    %28 = tpu.memref_slice %arg7[%c2_i32_14] : memref<8x!tpu.dma_semaphore, #tpu.memory_space<semaphore_mem>> -> memref<1x!tpu.dma_semaphore, #tpu.memory_space<semaphore_mem>>
    %29 = tpu.memref_squeeze %28 : memref<1x!tpu.dma_semaphore, #tpu.memory_space<semaphore_mem>> -> memref<!tpu.dma_semaphore, #tpu.memory_space<semaphore_mem>>
    tpu.enqueue_dma source(%26 : memref<1x128xf32, #tpu.memory_space<any>>) target(%27 : memref<1x128xf32, #tpu.memory_space<vmem>>) target_semaphore(%29 : memref<!tpu.dma_semaphore, #tpu.memory_space<semaphore_mem>>)
    %c3_i32 = arith.constant 3 : i32
    %30 = arith.addi %2, %c3_i32 : i32
    %31 = arith.index_cast %30 : i32 to index
    %32 = memref.load %arg2[%31] : memref<16xi32, #tpu.memory_space<smem>>
    %c0_i32_18 = arith.constant 0 : i32
    %c63_i32_19 = arith.constant 63 : i32
    %33 = arith.maxsi %c0_i32_18, %32 : i32
    %34 = arith.minsi %c63_i32_19, %33 : i32
    %c3_i32_20 = arith.constant 3 : i32
    %c0_i32_21 = arith.constant 0 : i32
    %35 = tpu.memref_slice %arg3[%34, %c0_i32_21] : memref<64x128xf32, #tpu.memory_space<any>> -> memref<1x128xf32, #tpu.memory_space<any>>
    %c3_i32_22 = arith.constant 3 : i32
    %c0_i32_23 = arith.constant 0 : i32
    %36 = tpu.memref_slice %arg6[%c3_i32_22, %c0_i32_23] : memref<8x128xf32, #tpu.memory_space<vmem>> -> memref<1x128xf32, #tpu.memory_space<vmem>>
    %37 = tpu.memref_slice %arg7[%c3_i32_20] : memref<8x!tpu.dma_semaphore, #tpu.memory_space<semaphore_mem>> -> memref<1x!tpu.dma_semaphore, #tpu.memory_space<semaphore_mem>>
    %38 = tpu.memref_squeeze %37 : memref<1x!tpu.dma_semaphore, #tpu.memory_space<semaphore_mem>> -> memref<!tpu.dma_semaphore, #tpu.memory_space<semaphore_mem>>
    tpu.enqueue_dma source(%35 : memref<1x128xf32, #tpu.memory_space<any>>) target(%36 : memref<1x128xf32, #tpu.memory_space<vmem>>) target_semaphore(%38 : memref<!tpu.dma_semaphore, #tpu.memory_space<semaphore_mem>>)
    %c4_i32 = arith.constant 4 : i32
    %39 = arith.addi %2, %c4_i32 : i32
    %40 = arith.index_cast %39 : i32 to index
    %41 = memref.load %arg2[%40] : memref<16xi32, #tpu.memory_space<smem>>
    %c0_i32_24 = arith.constant 0 : i32
    %c63_i32_25 = arith.constant 63 : i32
    %42 = arith.maxsi %c0_i32_24, %41 : i32
    %43 = arith.minsi %c63_i32_25, %42 : i32
    %c4_i32_26 = arith.constant 4 : i32
    %c0_i32_27 = arith.constant 0 : i32
    %44 = tpu.memref_slice %arg3[%43, %c0_i32_27] : memref<64x128xf32, #tpu.memory_space<any>> -> memref<1x128xf32, #tpu.memory_space<any>>
    %c4_i32_28 = arith.constant 4 : i32
    %c0_i32_29 = arith.constant 0 : i32
    %45 = tpu.memref_slice %arg6[%c4_i32_28, %c0_i32_29] : memref<8x128xf32, #tpu.memory_space<vmem>> -> memref<1x128xf32, #tpu.memory_space<vmem>>
    %46 = tpu.memref_slice %arg7[%c4_i32_26] : memref<8x!tpu.dma_semaphore, #tpu.memory_space<semaphore_mem>> -> memref<1x!tpu.dma_semaphore, #tpu.memory_space<semaphore_mem>>
    %47 = tpu.memref_squeeze %46 : memref<1x!tpu.dma_semaphore, #tpu.memory_space<semaphore_mem>> -> memref<!tpu.dma_semaphore, #tpu.memory_space<semaphore_mem>>
    tpu.enqueue_dma source(%44 : memref<1x128xf32, #tpu.memory_space<any>>) target(%45 : memref<1x128xf32, #tpu.memory_space<vmem>>) target_semaphore(%47 : memref<!tpu.dma_semaphore, #tpu.memory_space<semaphore_mem>>)
    %c5_i32 = arith.constant 5 : i32
    %48 = arith.addi %2, %c5_i32 : i32
    %49 = arith.index_cast %48 : i32 to index
    %50 = memref.load %arg2[%49] : memref<16xi32, #tpu.memory_space<smem>>
    %c0_i32_30 = arith.constant 0 : i32
    %c63_i32_31 = arith.constant 63 : i32
    %51 = arith.maxsi %c0_i32_30, %50 : i32
    %52 = arith.minsi %c63_i32_31, %51 : i32
    %c5_i32_32 = arith.constant 5 : i32
    %c0_i32_33 = arith.constant 0 : i32
    %53 = tpu.memref_slice %arg3[%52, %c0_i32_33] : memref<64x128xf32, #tpu.memory_space<any>> -> memref<1x128xf32, #tpu.memory_space<any>>
    %c5_i32_34 = arith.constant 5 : i32
    %c0_i32_35 = arith.constant 0 : i32
    %54 = tpu.memref_slice %arg6[%c5_i32_34, %c0_i32_35] : memref<8x128xf32, #tpu.memory_space<vmem>> -> memref<1x128xf32, #tpu.memory_space<vmem>>
    %55 = tpu.memref_slice %arg7[%c5_i32_32] : memref<8x!tpu.dma_semaphore, #tpu.memory_space<semaphore_mem>> -> memref<1x!tpu.dma_semaphore, #tpu.memory_space<semaphore_mem>>
    %56 = tpu.memref_squeeze %55 : memref<1x!tpu.dma_semaphore, #tpu.memory_space<semaphore_mem>> -> memref<!tpu.dma_semaphore, #tpu.memory_space<semaphore_mem>>
    tpu.enqueue_dma source(%53 : memref<1x128xf32, #tpu.memory_space<any>>) target(%54 : memref<1x128xf32, #tpu.memory_space<vmem>>) target_semaphore(%56 : memref<!tpu.dma_semaphore, #tpu.memory_space<semaphore_mem>>)
    %c6_i32 = arith.constant 6 : i32
    %57 = arith.addi %2, %c6_i32 : i32
    %58 = arith.index_cast %57 : i32 to index
    %59 = memref.load %arg2[%58] : memref<16xi32, #tpu.memory_space<smem>>
    %c0_i32_36 = arith.constant 0 : i32
    %c63_i32_37 = arith.constant 63 : i32
    %60 = arith.maxsi %c0_i32_36, %59 : i32
    %61 = arith.minsi %c63_i32_37, %60 : i32
    %c6_i32_38 = arith.constant 6 : i32
    %c0_i32_39 = arith.constant 0 : i32
    %62 = tpu.memref_slice %arg3[%61, %c0_i32_39] : memref<64x128xf32, #tpu.memory_space<any>> -> memref<1x128xf32, #tpu.memory_space<any>>
    %c6_i32_40 = arith.constant 6 : i32
    %c0_i32_41 = arith.constant 0 : i32
    %63 = tpu.memref_slice %arg6[%c6_i32_40, %c0_i32_41] : memref<8x128xf32, #tpu.memory_space<vmem>> -> memref<1x128xf32, #tpu.memory_space<vmem>>
    %64 = tpu.memref_slice %arg7[%c6_i32_38] : memref<8x!tpu.dma_semaphore, #tpu.memory_space<semaphore_mem>> -> memref<1x!tpu.dma_semaphore, #tpu.memory_space<semaphore_mem>>
    %65 = tpu.memref_squeeze %64 : memref<1x!tpu.dma_semaphore, #tpu.memory_space<semaphore_mem>> -> memref<!tpu.dma_semaphore, #tpu.memory_space<semaphore_mem>>
    tpu.enqueue_dma source(%62 : memref<1x128xf32, #tpu.memory_space<any>>) target(%63 : memref<1x128xf32, #tpu.memory_space<vmem>>) target_semaphore(%65 : memref<!tpu.dma_semaphore, #tpu.memory_space<semaphore_mem>>)
    %c7_i32 = arith.constant 7 : i32
    %66 = arith.addi %2, %c7_i32 : i32
    %67 = arith.index_cast %66 : i32 to index
    %68 = memref.load %arg2[%67] : memref<16xi32, #tpu.memory_space<smem>>
    %c0_i32_42 = arith.constant 0 : i32
    %c63_i32_43 = arith.constant 63 : i32
    %69 = arith.maxsi %c0_i32_42, %68 : i32
    %70 = arith.minsi %c63_i32_43, %69 : i32
    %c7_i32_44 = arith.constant 7 : i32
    %c0_i32_45 = arith.constant 0 : i32
    %71 = tpu.memref_slice %arg3[%70, %c0_i32_45] : memref<64x128xf32, #tpu.memory_space<any>> -> memref<1x128xf32, #tpu.memory_space<any>>
    %c7_i32_46 = arith.constant 7 : i32
    %c0_i32_47 = arith.constant 0 : i32
    %72 = tpu.memref_slice %arg6[%c7_i32_46, %c0_i32_47] : memref<8x128xf32, #tpu.memory_space<vmem>> -> memref<1x128xf32, #tpu.memory_space<vmem>>
    %73 = tpu.memref_slice %arg7[%c7_i32_44] : memref<8x!tpu.dma_semaphore, #tpu.memory_space<semaphore_mem>> -> memref<1x!tpu.dma_semaphore, #tpu.memory_space<semaphore_mem>>
    %74 = tpu.memref_squeeze %73 : memref<1x!tpu.dma_semaphore, #tpu.memory_space<semaphore_mem>> -> memref<!tpu.dma_semaphore, #tpu.memory_space<semaphore_mem>>
    tpu.enqueue_dma source(%71 : memref<1x128xf32, #tpu.memory_space<any>>) target(%72 : memref<1x128xf32, #tpu.memory_space<vmem>>) target_semaphore(%74 : memref<!tpu.dma_semaphore, #tpu.memory_space<semaphore_mem>>)
    %c0_i32_48 = arith.constant 0 : i32
    %c0_i32_49 = arith.constant 0 : i32
    %c0_i32_50 = arith.constant 0 : i32
    %75 = tpu.memref_slice %arg3[%c0_i32_49, %c0_i32_50] : memref<64x128xf32, #tpu.memory_space<any>> -> memref<1x128xf32, #tpu.memory_space<any>>
    %c0_i32_51 = arith.constant 0 : i32
    %c0_i32_52 = arith.constant 0 : i32
    %76 = tpu.memref_slice %arg6[%c0_i32_51, %c0_i32_52] : memref<8x128xf32, #tpu.memory_space<vmem>> -> memref<1x128xf32, #tpu.memory_space<vmem>>
    %77 = tpu.memref_slice %arg7[%c0_i32_48] : memref<8x!tpu.dma_semaphore, #tpu.memory_space<semaphore_mem>> -> memref<1x!tpu.dma_semaphore, #tpu.memory_space<semaphore_mem>>
    %78 = tpu.memref_squeeze %77 : memref<1x!tpu.dma_semaphore, #tpu.memory_space<semaphore_mem>> -> memref<!tpu.dma_semaphore, #tpu.memory_space<semaphore_mem>>
    tpu.wait_dma2 semaphore(%78 : memref<!tpu.dma_semaphore, #tpu.memory_space<semaphore_mem>>) src(%75 : memref<1x128xf32, #tpu.memory_space<any>>) dst(%76 : memref<1x128xf32, #tpu.memory_space<vmem>>)
    %c1_i32_53 = arith.constant 1 : i32
    %c0_i32_54 = arith.constant 0 : i32
    %c0_i32_55 = arith.constant 0 : i32
    %79 = tpu.memref_slice %arg3[%c0_i32_54, %c0_i32_55] : memref<64x128xf32, #tpu.memory_space<any>> -> memref<1x128xf32, #tpu.memory_space<any>>
    %c1_i32_56 = arith.constant 1 : i32
    %c0_i32_57 = arith.constant 0 : i32
    %80 = tpu.memref_slice %arg6[%c1_i32_56, %c0_i32_57] : memref<8x128xf32, #tpu.memory_space<vmem>> -> memref<1x128xf32, #tpu.memory_space<vmem>>
    %81 = tpu.memref_slice %arg7[%c1_i32_53] : memref<8x!tpu.dma_semaphore, #tpu.memory_space<semaphore_mem>> -> memref<1x!tpu.dma_semaphore, #tpu.memory_space<semaphore_mem>>
    %82 = tpu.memref_squeeze %81 : memref<1x!tpu.dma_semaphore, #tpu.memory_space<semaphore_mem>> -> memref<!tpu.dma_semaphore, #tpu.memory_space<semaphore_mem>>
    tpu.wait_dma2 semaphore(%82 : memref<!tpu.dma_semaphore, #tpu.memory_space<semaphore_mem>>) src(%79 : memref<1x128xf32, #tpu.memory_space<any>>) dst(%80 : memref<1x128xf32, #tpu.memory_space<vmem>>)
    %c2_i32_58 = arith.constant 2 : i32
    %c0_i32_59 = arith.constant 0 : i32
    %c0_i32_60 = arith.constant 0 : i32
    %83 = tpu.memref_slice %arg3[%c0_i32_59, %c0_i32_60] : memref<64x128xf32, #tpu.memory_space<any>> -> memref<1x128xf32, #tpu.memory_space<any>>
    %c2_i32_61 = arith.constant 2 : i32
    %c0_i32_62 = arith.constant 0 : i32
    %84 = tpu.memref_slice %arg6[%c2_i32_61, %c0_i32_62] : memref<8x128xf32, #tpu.memory_space<vmem>> -> memref<1x128xf32, #tpu.memory_space<vmem>>
    %85 = tpu.memref_slice %arg7[%c2_i32_58] : memref<8x!tpu.dma_semaphore, #tpu.memory_space<semaphore_mem>> -> memref<1x!tpu.dma_semaphore, #tpu.memory_space<semaphore_mem>>
    %86 = tpu.memref_squeeze %85 : memref<1x!tpu.dma_semaphore, #tpu.memory_space<semaphore_mem>> -> memref<!tpu.dma_semaphore, #tpu.memory_space<semaphore_mem>>
    tpu.wait_dma2 semaphore(%86 : memref<!tpu.dma_semaphore, #tpu.memory_space<semaphore_mem>>) src(%83 : memref<1x128xf32, #tpu.memory_space<any>>) dst(%84 : memref<1x128xf32, #tpu.memory_space<vmem>>)
    %c3_i32_63 = arith.constant 3 : i32
    %c0_i32_64 = arith.constant 0 : i32
    %c0_i32_65 = arith.constant 0 : i32
    %87 = tpu.memref_slice %arg3[%c0_i32_64, %c0_i32_65] : memref<64x128xf32, #tpu.memory_space<any>> -> memref<1x128xf32, #tpu.memory_space<any>>
    %c3_i32_66 = arith.constant 3 : i32
    %c0_i32_67 = arith.constant 0 : i32
    %88 = tpu.memref_slice %arg6[%c3_i32_66, %c0_i32_67] : memref<8x128xf32, #tpu.memory_space<vmem>> -> memref<1x128xf32, #tpu.memory_space<vmem>>
    %89 = tpu.memref_slice %arg7[%c3_i32_63] : memref<8x!tpu.dma_semaphore, #tpu.memory_space<semaphore_mem>> -> memref<1x!tpu.dma_semaphore, #tpu.memory_space<semaphore_mem>>
    %90 = tpu.memref_squeeze %89 : memref<1x!tpu.dma_semaphore, #tpu.memory_space<semaphore_mem>> -> memref<!tpu.dma_semaphore, #tpu.memory_space<semaphore_mem>>
    tpu.wait_dma2 semaphore(%90 : memref<!tpu.dma_semaphore, #tpu.memory_space<semaphore_mem>>) src(%87 : memref<1x128xf32, #tpu.memory_space<any>>) dst(%88 : memref<1x128xf32, #tpu.memory_space<vmem>>)
    %c4_i32_68 = arith.constant 4 : i32
    %c0_i32_69 = arith.constant 0 : i32
    %c0_i32_70 = arith.constant 0 : i32
    %91 = tpu.memref_slice %arg3[%c0_i32_69, %c0_i32_70] : memref<64x128xf32, #tpu.memory_space<any>> -> memref<1x128xf32, #tpu.memory_space<any>>
    %c4_i32_71 = arith.constant 4 : i32
    %c0_i32_72 = arith.constant 0 : i32
    %92 = tpu.memref_slice %arg6[%c4_i32_71, %c0_i32_72] : memref<8x128xf32, #tpu.memory_space<vmem>> -> memref<1x128xf32, #tpu.memory_space<vmem>>
    %93 = tpu.memref_slice %arg7[%c4_i32_68] : memref<8x!tpu.dma_semaphore, #tpu.memory_space<semaphore_mem>> -> memref<1x!tpu.dma_semaphore, #tpu.memory_space<semaphore_mem>>
    %94 = tpu.memref_squeeze %93 : memref<1x!tpu.dma_semaphore, #tpu.memory_space<semaphore_mem>> -> memref<!tpu.dma_semaphore, #tpu.memory_space<semaphore_mem>>
    tpu.wait_dma2 semaphore(%94 : memref<!tpu.dma_semaphore, #tpu.memory_space<semaphore_mem>>) src(%91 : memref<1x128xf32, #tpu.memory_space<any>>) dst(%92 : memref<1x128xf32, #tpu.memory_space<vmem>>)
    %c5_i32_73 = arith.constant 5 : i32
    %c0_i32_74 = arith.constant 0 : i32
    %c0_i32_75 = arith.constant 0 : i32
    %95 = tpu.memref_slice %arg3[%c0_i32_74, %c0_i32_75] : memref<64x128xf32, #tpu.memory_space<any>> -> memref<1x128xf32, #tpu.memory_space<any>>
    %c5_i32_76 = arith.constant 5 : i32
    %c0_i32_77 = arith.constant 0 : i32
    %96 = tpu.memref_slice %arg6[%c5_i32_76, %c0_i32_77] : memref<8x128xf32, #tpu.memory_space<vmem>> -> memref<1x128xf32, #tpu.memory_space<vmem>>
    %97 = tpu.memref_slice %arg7[%c5_i32_73] : memref<8x!tpu.dma_semaphore, #tpu.memory_space<semaphore_mem>> -> memref<1x!tpu.dma_semaphore, #tpu.memory_space<semaphore_mem>>
    %98 = tpu.memref_squeeze %97 : memref<1x!tpu.dma_semaphore, #tpu.memory_space<semaphore_mem>> -> memref<!tpu.dma_semaphore, #tpu.memory_space<semaphore_mem>>
    tpu.wait_dma2 semaphore(%98 : memref<!tpu.dma_semaphore, #tpu.memory_space<semaphore_mem>>) src(%95 : memref<1x128xf32, #tpu.memory_space<any>>) dst(%96 : memref<1x128xf32, #tpu.memory_space<vmem>>)
    %c6_i32_78 = arith.constant 6 : i32
    %c0_i32_79 = arith.constant 0 : i32
    %c0_i32_80 = arith.constant 0 : i32
    %99 = tpu.memref_slice %arg3[%c0_i32_79, %c0_i32_80] : memref<64x128xf32, #tpu.memory_space<any>> -> memref<1x128xf32, #tpu.memory_space<any>>
    %c6_i32_81 = arith.constant 6 : i32
    %c0_i32_82 = arith.constant 0 : i32
    %100 = tpu.memref_slice %arg6[%c6_i32_81, %c0_i32_82] : memref<8x128xf32, #tpu.memory_space<vmem>> -> memref<1x128xf32, #tpu.memory_space<vmem>>
    %101 = tpu.memref_slice %arg7[%c6_i32_78] : memref<8x!tpu.dma_semaphore, #tpu.memory_space<semaphore_mem>> -> memref<1x!tpu.dma_semaphore, #tpu.memory_space<semaphore_mem>>
    %102 = tpu.memref_squeeze %101 : memref<1x!tpu.dma_semaphore, #tpu.memory_space<semaphore_mem>> -> memref<!tpu.dma_semaphore, #tpu.memory_space<semaphore_mem>>
    tpu.wait_dma2 semaphore(%102 : memref<!tpu.dma_semaphore, #tpu.memory_space<semaphore_mem>>) src(%99 : memref<1x128xf32, #tpu.memory_space<any>>) dst(%100 : memref<1x128xf32, #tpu.memory_space<vmem>>)
    %c7_i32_83 = arith.constant 7 : i32
    %c0_i32_84 = arith.constant 0 : i32
    %c0_i32_85 = arith.constant 0 : i32
    %103 = tpu.memref_slice %arg3[%c0_i32_84, %c0_i32_85] : memref<64x128xf32, #tpu.memory_space<any>> -> memref<1x128xf32, #tpu.memory_space<any>>
    %c7_i32_86 = arith.constant 7 : i32
    %c0_i32_87 = arith.constant 0 : i32
    %104 = tpu.memref_slice %arg6[%c7_i32_86, %c0_i32_87] : memref<8x128xf32, #tpu.memory_space<vmem>> -> memref<1x128xf32, #tpu.memory_space<vmem>>
    %105 = tpu.memref_slice %arg7[%c7_i32_83] : memref<8x!tpu.dma_semaphore, #tpu.memory_space<semaphore_mem>> -> memref<1x!tpu.dma_semaphore, #tpu.memory_space<semaphore_mem>>
    %106 = tpu.memref_squeeze %105 : memref<1x!tpu.dma_semaphore, #tpu.memory_space<semaphore_mem>> -> memref<!tpu.dma_semaphore, #tpu.memory_space<semaphore_mem>>
    tpu.wait_dma2 semaphore(%106 : memref<!tpu.dma_semaphore, #tpu.memory_space<semaphore_mem>>) src(%103 : memref<1x128xf32, #tpu.memory_space<any>>) dst(%104 : memref<1x128xf32, #tpu.memory_space<vmem>>)
    %c0 = arith.constant 0 : index
    %c0_88 = arith.constant 0 : index
    %107 = vector.load %arg6[%c0, %c0_88] : memref<8x128xf32, #tpu.memory_space<vmem>>, vector<8x128xf32>
    %c0_89 = arith.constant 0 : index
    %c0_90 = arith.constant 0 : index
    %108 = vector.load %arg4[%c0_89, %c0_90] : memref<8x128xf32, #tpu.memory_space<vmem>>, vector<8x128xf32>
    %109 = arith.addf %107, %108 : vector<8x128xf32>
    %c0_91 = arith.constant 0 : index
    %c0_92 = arith.constant 0 : index
    %c0_93 = arith.constant 0 : index
    %110 = vector.load %arg5[%c0_91, %c0_92, %c0_93] : memref<1x8x128xf32, #tpu.memory_space<vmem>>, vector<1x8x128xf32>
    %111 = vector.shape_cast %110 : vector<1x8x128xf32> to vector<8x128xf32>
    %112 = vector.shape_cast %109 : vector<8x128xf32> to vector<1x8x128xf32>
    tpu.vector_store %arg5[%c0_91, %c0_92, %c0_93], %112 {strides = array<i32>} : memref<1x8x128xf32, #tpu.memory_space<vmem>>, vector<1x8x128xf32>,
    return
  }
  func.func @transform_1(%arg0: i32, %arg1: i32, %arg2: memref<16xi32, #tpu.memory_space<smem>>) -> (i32, i32) {
    %c0_i32 = arith.constant 0 : i32
    %c0_i32_0 = arith.constant 0 : i32
    return %arg0, %c0_i32 : i32, i32
  }
  func.func @transform_2(%arg0: i32, %arg1: i32, %arg2: memref<16xi32, #tpu.memory_space<smem>>) -> (i32, i32, i32) {
    %c0_i32 = arith.constant 0 : i32
    %c0_i32_0 = arith.constant 0 : i32
    return %arg1, %arg0, %c0_i32 : i32, i32, i32
  }
}

</mosaic_0001>

<llo_original>
// kernel: tpu_custom_call.1
$region0: #{tpu_custom_call.1}
  #allocation0 [shape = 'u32[]', space=smem, size = 0x4, offset = 0x4, fixed_abs, tag = 'smem constant byte address 0x4 - core index']
  #allocation1 [shape = 'u32[144,128]{1,0:T(1,128)}', space=vmem, size = 0x12000, scoped, tag = 'internal scratch']
  #allocation2 [shape = 'f32[8,128]{1,0:T(8,128)}', space=vmem, size = 0x1000, scoped, tag = 'scratch operand']
  #allocation3 [shape = 's32[8]{0}', space=sflag, size = 0x20, scoped, tag = 'scratch operand']
  #allocation4 [shape = 's32[1]{0}', space=sflag, size = 0x4, scoped, tag = 'scoped memory for tpu_custom_call.1']
  #allocation5 [shape = 'u8[512]{0}', space=smem, size = 0x200, scoped, tag = 'prefetched SMEM operand 0']
  #allocation10 [shape = 's32[]', space=sflag, size = 0x4, offset = 0, fixed_abs, tag = 'sflag constant byte address 0x0 - dummy sync flag']
  #allocation11 [shape = 's32[]', space=sflag, size = 0x4, offset = 0, fixed_abs, tag = 'sflag constant byte address 0x0 - dummy sync flag']
  #allocation12 [shape = 'u32[]', space=smem, size = 0x4, offset = 0x44, fixed_abs, tag = 'smem constant byte address 0x44 - assertion arg 0']
  #allocation13 [shape = 'u32[]', space=smem, size = 0x4, offset = 0x48, fixed_abs, tag = 'smem constant byte address 0x48 - assertion arg 1']
  #allocation14 [shape = 's32[]', space=sflag, size = 0x4, offset = 0, fixed_abs, tag = 'sflag constant byte address 0x0 - dummy sync flag']
  #allocation15 [shape = 's32[]', space=sflag, size = 0x4, offset = 0, fixed_abs, tag = 'sflag constant byte address 0x0 - dummy sync flag']
  #allocation16 [shape = 's32[]', space=sflag, size = 0x4, offset = 0, fixed_abs, tag = 'sflag constant byte address 0x0 - dummy sync flag']
  #allocation17 [shape = 's32[]', space=sflag, size = 0x4, offset = 0, fixed_abs, tag = 'sflag constant byte address 0x0 - dummy sync flag']
  #allocation18 [shape = 's32[]', space=sflag, size = 0x4, offset = 0, fixed_abs, tag = 'sflag constant byte address 0x0 - dummy sync flag']
  #allocation19 [shape = 's32[]', space=sflag, size = 0x4, offset = 0, fixed_abs, tag = 'sflag constant byte address 0x0 - dummy sync flag']
  #allocation20 [shape = 's32[]', space=sflag, size = 0x4, offset = 0, fixed_abs, tag = 'sflag constant byte address 0x0 - dummy sync flag']
  #allocation21 [shape = 's32[]', space=sflag, size = 0x4, offset = 0, fixed_abs, tag = 'sflag constant byte address 0x0 - dummy sync flag']
  #allocation22 [shape = 's32[]', space=sflag, size = 0x4, offset = 0, fixed_abs, tag = 'sflag constant byte address 0x0 - dummy sync flag']
  #allocation23 [shape = 's32[]', space=sflag, size = 0x4, offset = 0, fixed_abs, tag = 'sflag constant byte address 0x0 - dummy sync flag']
  #allocation24 [shape = 's32[]', space=sflag, size = 0x4, offset = 0, fixed_abs, tag = 'sflag constant byte address 0x0 - dummy sync flag']
  #allocation25 [shape = 's32[]', space=sflag, size = 0x4, offset = 0, fixed_abs, tag = 'sflag constant byte address 0x0 - dummy sync flag']
  #allocation26 [shape = 's32[]', space=sflag, size = 0x4, offset = 0, fixed_abs, tag = 'sflag constant byte address 0x0 - dummy sync flag']
  #allocation27 [shape = 's32[]', space=sflag, size = 0x4, offset = 0, fixed_abs, tag = 'sflag constant byte address 0x0 - dummy sync flag']
  %s0 = inlined_call_operand.hbm [shape: s32[16], index: 0, kind: input, shape index: {}]
  %s1 = inlined_call_operand.hbm [shape: f32[64,128], index: 1, kind: input, shape index: {}]
  %s2 = inlined_call_operand.hbm [shape: f32[8,128], index: 2, kind: input, shape index: {}]
  %s3 = inlined_call_operand.hbm [shape: f32[2,8,128], index: 3, kind: output, shape index: {}]
  %s4 = sld [smem:[#allocation0]]
  $region73: #{tpu_custom_call.1} parent=0
    _
  %s6 = ssub.s32 1, %s4
  %s7 = scalar_select 0, %s6, %s4
  %9 = dma.hbm_to_smem %s0, 16, [#allocation5], [#allocation4]
  %10 = dma.done [#allocation4], 16
  %11 = sfence
  $region1: #{tpu_custom_call.1} parent=0
    #allocation6 [shape = 'u8[4096]{0}', space=vmem, size = 0x1000, scoped, tag = 'input window, operand 2, single buffered']
    #allocation7 [shape = 's32[2]{0}', space=sflag, size = 0x8, scoped, tag = 'scoped memory for tpu_custom_call.1']
    #allocation8 [shape = 's32[2]{0}', space=sflag, size = 0x8, scoped, tag = 'scoped memory for tpu_custom_call.1']
    #allocation9 [shape = 'u8[8192]{0}', space=vmem, size = 0x2000, scoped, tag = 'output window, operand 0']
    %12 = vsyncpa [#allocation7], 0
    %13 = vsyncpa [#allocation8], 0
    %s14 = scalar_lea.sflag [#allocation8], 1
    %15 = vsyncpa %s14, 0
    loop: start=0, step=1, limit=4
    $region2: #{tpu_custom_call.1} parent=1 // loop_pre_header
      _
    $region3: #{tpu_custom_call.1} parent=1 // loop_header
      %s17 = sphi 0, %s21
      %p18 = scmp.ge.s32.totalorder %s17, 4
      %s24 = sphi 0, %s36
      %s25 = sphi 0, %s32
      %s26 = sphi 0, %s24
      %s27 = sphi 0, %s25
      %s28 = sphi 0, %s26
      %s29 = sphi 0, %s27
      %s39 = sphi 0, %s41
      %s42 = sphi 0, %s39
      %s43 = sphi 0, %s42
      %s59 = sphi 0, %s43
      %s67 = sphi 0, %s69
      %s70 = sphi 0, %s67
      %s71 = sphi 0, %s70
      %s87 = sphi 0, %s71
    $region4: #{tpu_custom_call.1} parent=1 // loop_header_branch
      %20 = sbr.rel (%p18) target = $region8
    $region5: #{tpu_custom_call.1} parent=1 // loop_body
      %s22 = ssub.s32 %s17, 1
      %s23 = ssub.s32 %s17, 2
      %s30 = sadd.s32 1, %s25
      %p31 = scmp.ge.s32.totalorder %s30, 2
      %s32 = scalar_select %p31, 0, %s30
      %s33 = sadd.s32 1, %s24
      %s34 = scalar_select %p31, %s33, %s24
      %p35 = scmp.ge.s32.totalorder %s34, 1
      %s36 = scalar_select %p35, 0, %s34
      %s37 = ssub.s32 %s24, %s36
      %p38 = scmp.eq.s32.totalorder %s37, 0
      %s40 = sadd.s32 %s39, 1
      %s41 = scalar_select %p38, %s39, %s40
      %p44 = pneg %p38
      %p45 = scmp.eq.s32.totalorder %s17, 1
      %p46 = por %p44, %p45
      %p47 = scmp.ne.s32.totalorder %s39, %s42
      %p48 = scmp.eq.s32.totalorder %s17, 0
      %p49 = por %p47, %p48
      %p50 = scmp.ne.s32.totalorder %s39, %s42
      %p51 = scmp.eq.s32.totalorder %s22, 1
      %p52 = por %p50, %p51
      %p53 = scmp.ne.s32.totalorder %s42, %s43
      %p54 = scmp.eq.s32.totalorder %s22, 0
      %p55 = por %p53, %p54
      %p56 = scmp.ne.s32.totalorder %s42, %s43
      %p57 = scmp.eq.s32.totalorder %s23, 1
      %p58 = por %p56, %p57
      %p60 = scmp.ne.s32.totalorder %s43, %s59
      %p61 = scmp.eq.s32.totalorder %s23, 0
      %p62 = por %p60, %p61
      %s63 = ssub.s32 %s25, %s32
      %s64 = ssub.s32 %s24, %s36
      %s65 = sor.u32 %s63, %s64
      %p66 = scmp.eq.s32.totalorder %s65, 0
      %s68 = sadd.s32 %s67, 1
      %s69 = scalar_select %p66, %s67, %s68
      %p72 = pneg %p66
      %p73 = scmp.eq.s32.totalorder %s17, 1
      %p74 = por %p72, %p73
      %p75 = scmp.ne.s32.totalorder %s67, %s70
      %p76 = scmp.eq.s32.totalorder %s17, 0
      %p77 = por %p75, %p76
      %p78 = scmp.ne.s32.totalorder %s67, %s70
      %p79 = scmp.eq.s32.totalorder %s22, 1
      %p80 = por %p78, %p79
      %p81 = scmp.ne.s32.totalorder %s70, %s71
      %p82 = scmp.eq.s32.totalorder %s22, 0
      %p83 = por %p81, %p82
      %p84 = scmp.ne.s32.totalorder %s70, %s71
      %p85 = scmp.eq.s32.totalorder %s23, 1
      %p86 = por %p84, %p85
      %p88 = scmp.ne.s32.totalorder %s71, %s87
      %p89 = scmp.eq.s32.totalorder %s23, 0
      %p90 = por %p88, %p89
      %p91 = scmp.le.s32.totalorder 1, %s17
      %p92 = scmp.lt.s32.totalorder %s17, 3
      %p93 = pnand %p91, %p92
      %p94 = pneg %p93
      // Predicated region
      $region9: #{tpu_custom_call.1} parent=5 // pred_check
        _
      $region10: #{tpu_custom_call.1} parent=5 // pred_check_branch
        %96 = sbr.rel (%p93) target = $region12
      $region11: #{tpu_custom_call.1} parent=5 // pred_region
        %s97 = ssub.s32 %s17, 1
        // Predicated region
        $region13: #{tpu_custom_call.1} parent=11 // pred_check
          %p98 = pneg %p55
        $region14: #{tpu_custom_call.1} parent=11 // pred_check_branch
          %100 = sbr.rel (%p98) target = $region16
        $region15: #{tpu_custom_call.1} parent=11 // pred_region
          %s102 = ssub.s32 128, 128
          %103 = vsyncadd [#allocation7], %s102
          %s104 = smul.addr %s26, 128
          %s105 = scalar_lea.hbm %s2, %s104
          %s107 = sshll.u32 [#allocation6], 4
          %s108 = int_to_ptr.vmem [resolvable:$true] %s107
          %110 = dma.hbm_to_vmem [thread:$0]  %s105, 128, %s108, [#allocation7]
        $region16: #{tpu_custom_call.1} parent=11 // pred_fallthru
          _
      $region12: #{tpu_custom_call.1} parent=5 // pred_fallthru
        _
      %p111 = scmp.lt.s32.totalorder %s17, 2
      // Predicated region
      $region17: #{tpu_custom_call.1} parent=5 // pred_check
        %p112 = pneg %p111
      $region18: #{tpu_custom_call.1} parent=5 // pred_check_branch
        %114 = sbr.rel (%p112) target = $region20
      $region19: #{tpu_custom_call.1} parent=5 // pred_region
        _
      $region20: #{tpu_custom_call.1} parent=5 // pred_fallthru
        _
      %p115 = scmp.le.s32.totalorder 1, %s17
      %p116 = scmp.lt.s32.totalorder %s17, 3
      %p117 = pnand %p115, %p116
      %p118 = pneg %p117
      // Predicated region
      $region21: #{tpu_custom_call.1} parent=5 // pred_check
        _
      $region22: #{tpu_custom_call.1} parent=5 // pred_check_branch
        %120 = sbr.rel (%p117) target = $region24
      $region23: #{tpu_custom_call.1} parent=5 // pred_region
        %s121 = ssub.s32 %s17, 1
        // Predicated region
        $region25: #{tpu_custom_call.1} parent=23 // pred_check
          %p122 = pneg %p55
        $region26: #{tpu_custom_call.1} parent=23 // pred_check_branch
          %124 = sbr.rel (%p122) target = $region28
        $region27: #{tpu_custom_call.1} parent=23 // pred_region
          %125 = dma.done [#allocation7], 128
        $region28: #{tpu_custom_call.1} parent=23 // pred_fallthru
          _
        %p126 = pneg %p55
        %p127 = pneg %p52
        %p128 = pneg %p83
        %p129 = pneg %p80
        %s130 = sand.u32 %s70, 1
        %s131 = scalar_lea.sflag [#allocation8], %s130
        %s132 = sand.u32 %s70, 1
        %s133 = smul.addr %s132, 8
        %s134 = scalar_lea.vmem [#allocation9], %s133
        %s135 = smul.u32 %s27, 8
        %s136 = smul.u32 %s26, 8
        %s137 = sadd.s32 %s135, %s136
        %s138 = sld [smem:[#allocation5 + %s137]]
        %p139 = scmp.gt.s32.totalorder %s138, 0
        %s140 = scalar_select %p139, %s138, 0
        %p141 = scmp.lt.s32.totalorder %s140, 63
        %s142 = scalar_select %p141, %s140, 63
        %s143 = smul.addr %s142, 16
        %s144 = scalar_lea.hbm %s1, %s143
        // Predicated region
        $region29: #{tpu_custom_call.1} parent=23 // pred_check
          _
        $region30: #{tpu_custom_call.1} parent=23 // pred_check_branch
          %146 = sbr.rel target = $region32
        $region31: #{tpu_custom_call.1} parent=23 // pred_region
          %147 = sst [smem:[#allocation12]] [#allocation11]
          %148 = sst [smem:[#allocation13]] [#allocation10]
        $region32: #{tpu_custom_call.1} parent=23 // pred_fallthru
          _
        %150 = shalt.err (0)
        %s152 = sshll.u32 [#allocation2], 4
        %s153 = int_to_ptr.vmem [resolvable:$true] %s152
        %155 = dma.hbm_to_vmem [thread:$0]  %s144, 16, %s153, [#allocation3]
        %s156 = sadd.s32 %s137, 1
        %s157 = sld [smem:[#allocation5 + %s156]]
        %p158 = scmp.gt.s32.totalorder %s157, 0
        %s159 = scalar_select %p158, %s157, 0
        %p160 = scmp.lt.s32.totalorder %s159, 63
        %s161 = scalar_select %p160, %s159, 63
        %s162 = smul.addr %s161, 16
        %s163 = scalar_lea.hbm %s1, %s162
        %s164 = scalar_lea.vmem [#allocation2], 1
        %s165 = scalar_lea.sflag [#allocation3], 1
        // Predicated region
        $region33: #{tpu_custom_call.1} parent=23 // pred_check
          _
        $region34: #{tpu_custom_call.1} parent=23 // pred_check_branch
          %167 = sbr.rel target = $region36
        $region35: #{tpu_custom_call.1} parent=23 // pred_region
          %168 = sst [smem:[#allocation12]] [#allocation15]
          %169 = sst [smem:[#allocation13]] [#allocation14]
        $region36: #{tpu_custom_call.1} parent=23 // pred_fallthru
          _
        %171 = shalt.err (0)
        %s173 = sshll.u32 %s164, 4
        %s174 = int_to_ptr.vmem [resolvable:$true] %s173
        %176 = dma.hbm_to_vmem [thread:$0]  %s163, 16, %s174, %s165
        %s177 = sadd.s32 %s137, 2
        %s178 = sld [smem:[#allocation5 + %s177]]
        %p179 = scmp.gt.s32.totalorder %s178, 0
        %s180 = scalar_select %p179, %s178, 0
        %p181 = scmp.lt.s32.totalorder %s180, 63
        %s182 = scalar_select %p181, %s180, 63
        %s183 = smul.addr %s182, 16
        %s184 = scalar_lea.hbm %s1, %s183
        %s185 = scalar_lea.vmem [#allocation2], 2
        %s186 = scalar_lea.sflag [#allocation3], 2
        // Predicated region
        $region37: #{tpu_custom_call.1} parent=23 // pred_check
          _
        $region38: #{tpu_custom_call.1} parent=23 // pred_check_branch
          %188 = sbr.rel target = $region40
        $region39: #{tpu_custom_call.1} parent=23 // pred_region
          %189 = sst [smem:[#allocation12]] [#allocation17]
          %190 = sst [smem:[#allocation13]] [#allocation16]
        $region40: #{tpu_custom_call.1} parent=23 // pred_fallthru
          _
        %192 = shalt.err (0)
        %s194 = sshll.u32 %s185, 4
        %s195 = int_to_ptr.vmem [resolvable:$true] %s194
        %197 = dma.hbm_to_vmem [thread:$0]  %s184, 16, %s195, %s186
        %s198 = sadd.s32 %s137, 3
        %s199 = sld [smem:[#allocation5 + %s198]]
        %p200 = scmp.gt.s32.totalorder %s199, 0
        %s201 = scalar_select %p200, %s199, 0
        %p202 = scmp.lt.s32.totalorder %s201, 63
        %s203 = scalar_select %p202, %s201, 63
        %s204 = smul.addr %s203, 16
        %s205 = scalar_lea.hbm %s1, %s204
        %s206 = scalar_lea.vmem [#allocation2], 3
        %s207 = scalar_lea.sflag [#allocation3], 3
        // Predicated region
        $region41: #{tpu_custom_call.1} parent=23 // pred_check
          _
        $region42: #{tpu_custom_call.1} parent=23 // pred_check_branch
          %209 = sbr.rel target = $region44
        $region43: #{tpu_custom_call.1} parent=23 // pred_region
          %210 = sst [smem:[#allocation12]] [#allocation19]
          %211 = sst [smem:[#allocation13]] [#allocation18]
        $region44: #{tpu_custom_call.1} parent=23 // pred_fallthru
          _
        %213 = shalt.err (0)
        %s215 = sshll.u32 %s206, 4
        %s216 = int_to_ptr.vmem [resolvable:$true] %s215
        %218 = dma.hbm_to_vmem [thread:$0]  %s205, 16, %s216, %s207
        %s219 = sadd.s32 %s137, 4
        %s220 = sld [smem:[#allocation5 + %s219]]
        %p221 = scmp.gt.s32.totalorder %s220, 0
        %s222 = scalar_select %p221, %s220, 0
        %p223 = scmp.lt.s32.totalorder %s222, 63
        %s224 = scalar_select %p223, %s222, 63
        %s225 = smul.addr %s224, 16
        %s226 = scalar_lea.hbm %s1, %s225
        %s227 = scalar_lea.vmem [#allocation2], 4
        %s228 = scalar_lea.sflag [#allocation3], 4
        // Predicated region
        $region45: #{tpu_custom_call.1} parent=23 // pred_check
          _
        $region46: #{tpu_custom_call.1} parent=23 // pred_check_branch
          %230 = sbr.rel target = $region48
        $region47: #{tpu_custom_call.1} parent=23 // pred_region
          %231 = sst [smem:[#allocation12]] [#allocation21]
          %232 = sst [smem:[#allocation13]] [#allocation20]
        $region48: #{tpu_custom_call.1} parent=23 // pred_fallthru
          _
        %234 = shalt.err (0)
        %s236 = sshll.u32 %s227, 4
        %s237 = int_to_ptr.vmem [resolvable:$true] %s236
        %239 = dma.hbm_to_vmem [thread:$0]  %s226, 16, %s237, %s228
        %s240 = sadd.s32 %s137, 5
        %s241 = sld [smem:[#allocation5 + %s240]]
        %p242 = scmp.gt.s32.totalorder %s241, 0
        %s243 = scalar_select %p242, %s241, 0
        %p244 = scmp.lt.s32.totalorder %s243, 63
        %s245 = scalar_select %p244, %s243, 63
        %s246 = smul.addr %s245, 16
        %s247 = scalar_lea.hbm %s1, %s246
        %s248 = scalar_lea.vmem [#allocation2], 5
        %s249 = scalar_lea.sflag [#allocation3], 5
        // Predicated region
        $region49: #{tpu_custom_call.1} parent=23 // pred_check
          _
        $region50: #{tpu_custom_call.1} parent=23 // pred_check_branch
          %251 = sbr.rel target = $region52
        $region51: #{tpu_custom_call.1} parent=23 // pred_region
          %252 = sst [smem:[#allocation12]] [#allocation23]
          %253 = sst [smem:[#allocation13]] [#allocation22]
        $region52: #{tpu_custom_call.1} parent=23 // pred_fallthru
          _
        %255 = shalt.err (0)
        %s257 = sshll.u32 %s248, 4
        %s258 = int_to_ptr.vmem [resolvable:$true] %s257
        %260 = dma.hbm_to_vmem [thread:$0]  %s247, 16, %s258, %s249
        %s261 = sadd.s32 %s137, 6
        %s262 = sld [smem:[#allocation5 + %s261]]
        %p263 = scmp.gt.s32.totalorder %s262, 0
        %s264 = scalar_select %p263, %s262, 0
        %p265 = scmp.lt.s32.totalorder %s264, 63
        %s266 = scalar_select %p265, %s264, 63
        %s267 = smul.addr %s266, 16
        %s268 = scalar_lea.hbm %s1, %s267
        %s269 = scalar_lea.vmem [#allocation2], 6
        %s270 = scalar_lea.sflag [#allocation3], 6
        // Predicated region
        $region53: #{tpu_custom_call.1} parent=23 // pred_check
          _
        $region54: #{tpu_custom_call.1} parent=23 // pred_check_branch
          %272 = sbr.rel target = $region56
        $region55: #{tpu_custom_call.1} parent=23 // pred_region
          %273 = sst [smem:[#allocation12]] [#allocation25]
          %274 = sst [smem:[#allocation13]] [#allocation24]
        $region56: #{tpu_custom_call.1} parent=23 // pred_fallthru
          _
        %276 = shalt.err (0)
        %s278 = sshll.u32 %s269, 4
        %s279 = int_to_ptr.vmem [resolvable:$true] %s278
        %281 = dma.hbm_to_vmem [thread:$0]  %s268, 16, %s279, %s270
        %s282 = sadd.s32 %s137, 7
        %s283 = sld [smem:[#allocation5 + %s282]]
        %p284 = scmp.gt.s32.totalorder %s283, 0
        %s285 = scalar_select %p284, %s283, 0
        %p286 = scmp.lt.s32.totalorder %s285, 63
        %s287 = scalar_select %p286, %s285, 63
        %s288 = smul.addr %s287, 16
        %s289 = scalar_lea.hbm %s1, %s288
        %s290 = scalar_lea.vmem [#allocation2], 7
        %s291 = scalar_lea.sflag [#allocation3], 7
        // Predicated region
        $region57: #{tpu_custom_call.1} parent=23 // pred_check
          _
        $region58: #{tpu_custom_call.1} parent=23 // pred_check_branch
          %293 = sbr.rel target = $region60
        $region59: #{tpu_custom_call.1} parent=23 // pred_region
          %294 = sst [smem:[#allocation12]] [#allocation27]
          %295 = sst [smem:[#allocation13]] [#allocation26]
        $region60: #{tpu_custom_call.1} parent=23 // pred_fallthru
          _
        %297 = shalt.err (0)
        %s299 = sshll.u32 %s290, 4
        %s300 = int_to_ptr.vmem [resolvable:$true] %s299
        %302 = dma.hbm_to_vmem [thread:$0]  %s289, 16, %s300, %s291
        %s303 = smul.u32 1, 1
        %s304 = sshll.u32 %s303, 4
        %305 = dma.done [#allocation3], %s304
        %s306 = sshll.u32 %s303, 4
        %307 = dma.done %s165, %s306
        %s308 = sshll.u32 %s303, 4
        %309 = dma.done %s186, %s308
        %s310 = sshll.u32 %s303, 4
        %311 = dma.done %s207, %s310
        %s312 = sshll.u32 %s303, 4
        %313 = dma.done %s228, %s312
        %s314 = sshll.u32 %s303, 4
        %315 = dma.done %s249, %s314
        %s316 = sshll.u32 %s303, 4
        %317 = dma.done %s270, %s316
        %s318 = sshll.u32 %s303, 4
        %319 = dma.done %s291, %s318
        %v320 = vld [vmem:[#allocation2] sm:$0xff]
        %v321 = vld [vmem:[#allocation6] sm:$0xff]
        %v322 = vadd.f32 %v320, %v321
        %323 = vst [vmem:[%s134] sm:$0xff] %v322
        %s324 = sand.u32 %s70, 1
        %s325 = scalar_lea.sflag [#allocation8], %s324
        %s326 = sand.u32 %s70, 1
        %s327 = smul.addr %s326, 8
        %s328 = scalar_lea.vmem [#allocation9], %s327
        // Predicated region
        $region61: #{tpu_custom_call.1} parent=23 // pred_check
          %p329 = pneg %p80
        $region62: #{tpu_custom_call.1} parent=23 // pred_check_branch
          %331 = sbr.rel (%p329) target = $region64
        $region63: #{tpu_custom_call.1} parent=23 // pred_region
          %s333 = ssub.s32 128, 128
          %334 = vsyncadd %s325, %s333
          %s335 = sadd.s32 %s26, %s27
          %s336 = smul.addr %s335, 128
          %s337 = scalar_lea.hbm %s3, %s336
          %s339 = sshll.u32 %s328, 4
          %s340 = int_to_ptr.vmem [resolvable:$true] %s339
          %342 = dma.vmem_to_hbm [thread:$0]  %s340, 128, %s337, %s325
        $region64: #{tpu_custom_call.1} parent=23 // pred_fallthru
          _
      $region24: #{tpu_custom_call.1} parent=5 // pred_fallthru
        _
      %p343 = scmp.le.s32.totalorder 2, %s17
      // Predicated region
      $region65: #{tpu_custom_call.1} parent=5 // pred_check
        %p344 = pneg %p343
      $region66: #{tpu_custom_call.1} parent=5 // pred_check_branch
        %346 = sbr.rel (%p344) target = $region68
      $region67: #{tpu_custom_call.1} parent=5 // pred_region
        %s347 = ssub.s32 %s17, 2
        // Predicated region
        $region69: #{tpu_custom_call.1} parent=67 // pred_check
          %p348 = pneg %p86
        $region70: #{tpu_custom_call.1} parent=67 // pred_check_branch
          %350 = sbr.rel (%p348) target = $region72
        $region71: #{tpu_custom_call.1} parent=67 // pred_region
          %s351 = sand.u32 %s71, 1
          %s352 = scalar_lea.sflag [#allocation8], %s351
          %s353 = sand.u32 %s71, 1
          %s354 = smul.addr %s353, 8
          %s355 = scalar_lea.vmem [#allocation9], %s354
          %356 = dma.done %s352, 128
        $region72: #{tpu_custom_call.1} parent=67 // pred_fallthru
          _
      $region68: #{tpu_custom_call.1} parent=5 // pred_fallthru
        _
    $region6: #{tpu_custom_call.1} parent=1 // loop_footer
      %s21 = sadd.s32 1, %s17
    $region7: #{tpu_custom_call.1} parent=1 // loop_footer_branch
      %16 = sbr.rel target = $region3
    $region8: #{tpu_custom_call.1} parent=1 // loop_exit
      _
    %357 = vsyncpa [#allocation7], 1
    %s358 = scalar_lea.sflag [#allocation7], 1
    %359 = vsyncpa %s358, 1
    %360 = vsyncpa [#allocation8], 1
    %s361 = scalar_lea.sflag [#allocation8], 1
    %362 = vsyncpa %s361, 1
  %363 = vsyncmov [#allocation3]
  %s364 = vpop.sfrf %363
  %p365 = scmp.eq.s32.totalorder %s364, 0
  %p366 = pneg %p365
  %368 = shalt.err (%p366)
  %s369 = scalar_lea.sflag [#allocation3], 1
  %370 = vsyncmov %s369
  %s371 = vpop.sfrf %370
  %p372 = scmp.eq.s32.totalorder %s371, 0
  %p373 = pneg %p372
  %375 = shalt.err (%p373)
  %s376 = scalar_lea.sflag [#allocation3], 2
  %377 = vsyncmov %s376
  %s378 = vpop.sfrf %377
  %p379 = scmp.eq.s32.totalorder %s378, 0
  %p380 = pneg %p379
  %382 = shalt.err (%p380)
  %s383 = scalar_lea.sflag [#allocation3], 3
  %384 = vsyncmov %s383
  %s385 = vpop.sfrf %384
  %p386 = scmp.eq.s32.totalorder %s385, 0
  %p387 = pneg %p386
  %389 = shalt.err (%p387)
  %s390 = scalar_lea.sflag [#allocation3], 4
  %391 = vsyncmov %s390
  %s392 = vpop.sfrf %391
  %p393 = scmp.eq.s32.totalorder %s392, 0
  %p394 = pneg %p393
  %396 = shalt.err (%p394)
  %s397 = scalar_lea.sflag [#allocation3], 5
  %398 = vsyncmov %s397
  %s399 = vpop.sfrf %398
  %p400 = scmp.eq.s32.totalorder %s399, 0
  %p401 = pneg %p400
  %403 = shalt.err (%p401)
  %s404 = scalar_lea.sflag [#allocation3], 6
  %405 = vsyncmov %s404
  %s406 = vpop.sfrf %405
  %p407 = scmp.eq.s32.totalorder %s406, 0
  %p408 = pneg %p407
  %410 = shalt.err (%p408)
  %s411 = scalar_lea.sflag [#allocation3], 7
  %412 = vsyncmov %s411
  %s413 = vpop.sfrf %412
  %p414 = scmp.eq.s32.totalorder %s413, 0
  %p415 = pneg %p414
  %417 = shalt.err (%p415)

</llo_original>
